<compile_context>
chip_gen: v7x
topology: tpu7x:2x2x1
jax: 0.10.0
libtpu: 0.0.40
codegen_flags: <defaults>
</compile_context>

<pallas_src>
import jax
import jax.numpy as jnp
from jax import lax
from jax.experimental import pallas as pl
from jax.experimental.pallas import tpu as pltpu


def _round_up(x, m):
    return ((x + m - 1) // m) * m


def _vmem_budget_bytes():
    """Conservative scoped-VMEM budget derived from physical capacity.

    v5e/v6e (128 MiB) -> 96 MiB, v7x (64 MiB/TC) -> 48 MiB. Falls back to the
    tightest budget if the hardware query is unavailable.
    """
    try:
        cap = pltpu.get_tpu_info().vmem_capacity_bytes
    except Exception:
        cap = 64 * 1024 * 1024
    return int(cap * 3 // 4)


# ---------------------------------------------------------------------------
# Kernel bodies
# ---------------------------------------------------------------------------

def _tanh_ln_dense1(h, gamma_ref, beta_ref, w1_ref, b1_ref, out_ref):
    """tanh -> LayerNorm(eps=1e-5) -> dense_1, all on a [TM, H] f32 tile."""
    h = jnp.tanh(h)                                          # EUP, bounded [-1, 1]
    # One-pass LayerNorm: two independent row reductions, no `diff` temporary.
    mean = jnp.mean(h, axis=-1, keepdims=True)
    mean_sq = jnp.mean(h * h, axis=-1, keepdims=True)
    var = mean_sq - mean * mean                              # no cancellation risk after tanh
    hn = (h - mean) * lax.rsqrt(var + 1e-5)
    hn = hn * gamma_ref[...] + beta_ref[...]
    # dense_1: bf16 MXU operands, f32 accumulation, lane-dense (padded) columns.
    out = jnp.dot(hn.astype(jnp.bfloat16), w1_ref[...],
                  preferred_element_type=jnp.float32) + b1_ref[...]
    out_ref[...] = out.astype(out_ref.dtype)


def _kernel_split(x1_ref, x2_ref, w0a_ref, w0b_ref, b0_ref,
                  gamma_ref, beta_ref, w1_ref, b1_ref, out_ref):
    """dense_0 as two K=D matmuls: x_cat @ W0^T == x1 @ W0a + x2 @ W0b."""
    x1 = x1_ref[...].astype(jnp.bfloat16)                    # [TM, D]
    x2 = x2_ref[...].astype(jnp.bfloat16)                    # [TM, D]
    h = jnp.dot(x1, w0a_ref[...], preferred_element_type=jnp.float32)
    h = h + jnp.dot(x2, w0b_ref[...], preferred_element_type=jnp.float32)
    h = h + b0_ref[...]                                      # [1, H] broadcast
    _tanh_ln_dense1(h, gamma_ref, beta_ref, w1_ref, b1_ref, out_ref)


def _kernel_concat(x1_ref, x2_ref, w0_ref, b0_ref,
                   gamma_ref, beta_ref, w1_ref, b1_ref, out_ref):
    """dense_0 as one K=2D matmul (better MXU depth when D is small & lane-aligned)."""
    xc = jnp.concatenate([x1_ref[...], x2_ref[...]], axis=-1).astype(jnp.bfloat16)
    h = jnp.dot(xc, w0_ref[...], preferred_element_type=jnp.float32) + b0_ref[...]
    _tanh_ln_dense1(h, gamma_ref, beta_ref, w1_ref, b1_ref, out_ref)


# ---------------------------------------------------------------------------
# One-time parameter preparation (hoisted out of the per-call path)
# ---------------------------------------------------------------------------

def prepare_params(params, feat_dim):
    """Cast/split/pad the weights ONCE. Call at init, reuse every forward."""
    w0_t = jnp.asarray(params["w0"])                         # [2D, H] (== W0^T)
    H = w0_t.shape[1]
    assert w0_t.shape[0] == 2 * feat_dim, "dense_0 expects concat of two D-dim tensors"

    w1_t = jnp.asarray(params["w1"])                         # [H, C]  (== W1^T)
    C = w1_t.shape[1]
    CP = _round_up(max(C, 1), 128)                           # lane-dense output width

    # Fuse the concat into a single K=2D contraction only when D is lane-aligned
    # (no in-kernel relayout) and the fused depth still fits one MXU pass.
    fuse_concat = (feat_dim < 256) and (feat_dim % 128 == 0)

    prepped = {
        "b0": params["b0"].astype(jnp.float32).reshape(1, H),
        "gamma": params["gamma"].astype(jnp.float32).reshape(1, H),
        "beta": params["beta"].astype(jnp.float32).reshape(1, H),
        "w1": jnp.pad(w1_t, ((0, 0), (0, CP - C))).astype(jnp.bfloat16),     # [H, CP]
        "b1": jnp.pad(params["b1"].astype(jnp.float32).reshape(1, C),
                      ((0, 0), (0, CP - C))),                                # [1, CP]
    }
    if fuse_concat:
        prepped["w0"] = w0_t.astype(jnp.bfloat16)            # [2D, H]
    else:
        prepped["w0a"] = w0_t[:feat_dim].astype(jnp.bfloat16)  # [D, H]
        prepped["w0b"] = w0_t[feat_dim:].astype(jnp.bfloat16)  # [D, H]

    prepped = jax.tree_util.tree_map(jnp.asarray, prepped)
    meta = {"D": feat_dim, "H": H, "C": C, "CP": CP, "fuse_concat": fuse_concat}
    return prepped, meta


# ---------------------------------------------------------------------------
# Forward wrapper
# ---------------------------------------------------------------------------

def pooler_end_logits(hidden_states, start_positions, prepped, meta, *,
                      tm=512, out_dtype=None, keep_padded=False):
    """hidden_states, start_positions: [B, S, D] -> logits [B, S, num_classes].

    tm: row-tile size. 512 amortizes per-grid-step overhead on v6e while fitting
    v7x's 64 MiB VMEM; on v6e it can be raised to 1024. On v5e the kernel is
    MXU-bound and tm is irrelevant (256-1024 all fine).
    """
    B, S, D = hidden_states.shape
    assert D == meta["D"]
    M = B * S
    H, C, CP = meta["H"], meta["C"], meta["CP"]
    out_dtype = out_dtype or hidden_states.dtype

    # Layout plumbing only: reshapes are free, no concat / dtype copy of activations.
    x1 = hidden_states.reshape(M, D)
    x2 = start_positions.reshape(M, D)

    TM = min(tm, _round_up(M, 8))
    grid = (pl.cdiv(M, TM),)

    row = lambda shape: pl.BlockSpec(shape, lambda i: (i, 0))    # tiled over M
    fixed = lambda shape: pl.BlockSpec(shape, lambda i: (0, 0))  # VMEM-resident

    if meta["fuse_concat"]:
        kernel = _kernel_concat
        w0_specs = [fixed((2 * D, H))]
        w0_args = [prepped["w0"]]
    else:
        kernel = _kernel_split
        w0_specs = [fixed((D, H)), fixed((D, H))]
        w0_args = [prepped["w0a"], prepped["w0b"]]

    out = pl.pallas_call(
        kernel,
        out_shape=jax.ShapeDtypeStruct((M, CP), out_dtype),
        grid=grid,
        in_specs=[row((TM, D)), row((TM, D))] + w0_specs + [
            fixed((1, H)),      # b0
            fixed((1, H)),      # gamma
            fixed((1, H)),      # beta
            fixed((H, CP)),     # W1^T (padded)
            fixed((1, CP)),     # b1   (padded)
        ],
        out_specs=row((TM, CP)),
        compiler_params=pltpu.CompilerParams(
            dimension_semantics=("parallel",),
            vmem_limit_bytes=_vmem_budget_bytes(),
        ),
    )(x1, x2, *w0_args, prepped["b0"], prepped["gamma"], prepped["beta"],
      prepped["w1"], prepped["b1"])

    if keep_padded:
        # Consumer takes the lane-dense slab; no slice-copy HBM round trip.
        return out.reshape(B, S, CP)
    return out[:, :C].reshape(B, S, C)


# ---------------------------------------------------------------------------
# Synthetic parameters + pure-JAX reference
# ---------------------------------------------------------------------------

def init_params(key, hidden_size, num_classes):
    """Deterministic synthetic parameters (shapes match the nn.Module __init__)."""
    k0, k1 = jax.random.split(key, 2)
    H, Cc = hidden_size, num_classes
    # stored transposed so the kernel computes x @ W^T directly
    w0_t = jax.random.normal(k0, (H, H), jnp.float32) * 0.02
    b0 = jnp.zeros((1, H), jnp.float32) + 0.01
    gamma = jnp.ones((1, H), jnp.float32)
    beta = jnp.zeros((1, H), jnp.float32)
    w1_t = jax.random.normal(k1, (H, Cc), jnp.float32) * 0.02
    b1 = jnp.zeros((1, Cc), jnp.float32) - 0.01
    return {"w0": w0_t, "b0": b0, "gamma": gamma, "beta": beta,
            "w1": w1_t, "b1": b1}


def _reference(hidden_states, start_positions, params):
    """Pure-JAX f32 reference matching the PyTorch forward."""
    x = jnp.concatenate([hidden_states, start_positions], axis=-1)
    h = x @ params["w0"] + params["b0"][0]
    h = jnp.tanh(h)
    mean = jnp.mean(h, axis=-1, keepdims=True)
    var = jnp.mean((h - mean) ** 2, axis=-1, keepdims=True)
    hn = (h - mean) / jnp.sqrt(var + 1e-5)
    hn = hn * params["gamma"][0] + params["beta"][0]
    return hn @ params["w1"] + params["b1"][0]


if __name__ == "__main__":
    # small shapes: batch=2, seq=8, per-tensor feature dim D=16
    # -> concatenated hidden_size = 32, num_classes = 4
    B, S, D = 2, 8, 16
    hidden_size = 2 * D   # dense_0 input width (concat of two D-dim tensors)
    num_classes = 4

    key = jax.random.PRNGKey(0)
    k_h, k_s, k_p = jax.random.split(key, 3)
    hidden_states = jax.random.normal(k_h, (B, S, D), jnp.float32)
    start_positions = jax.random.normal(k_s, (B, S, D), jnp.float32)
    params = init_params(k_p, hidden_size, num_classes)

    # One-time parameter prep (hoisted out of the per-call path).
    prepped, meta = prepare_params(params, D)
    prepped = jax.block_until_ready(prepped)

    out = pooler_end_logits(hidden_states, start_positions, prepped, meta)
    out = jax.block_until_ready(out)

    ref = _reference(hidden_states, start_positions, params)
    assert out.shape == (B, S, num_classes)
    # bf16 MXU operands with f32 accumulation -> relaxed-but-tight tolerance
    assert jnp.allclose(out, ref, atol=1e-2, rtol=1e-2), "mismatch vs reference"

    print("KERNEL_OK")
</pallas_src>

<mosaic_0001>
module attributes {stable_mosaic.version = 11 : i64} {
  func.func @_kernel_split(%arg0: i32, %arg1: memref<16x16xf32, #tpu.memory_space<vmem>>, %arg2: memref<16x16xf32, #tpu.memory_space<vmem>>, %arg3: memref<16x32xbf16, #tpu.memory_space<vmem>>, %arg4: memref<16x32xbf16, #tpu.memory_space<vmem>>, %arg5: memref<1x32xf32, #tpu.memory_space<vmem>>, %arg6: memref<1x32xf32, #tpu.memory_space<vmem>>, %arg7: memref<1x32xf32, #tpu.memory_space<vmem>>, %arg8: memref<32x128xbf16, #tpu.memory_space<vmem>>, %arg9: memref<1x128xf32, #tpu.memory_space<vmem>>, %arg10: memref<16x128xf32, #tpu.memory_space<vmem>>) attributes {dimension_semantics = [#tpu.dimension_semantics<parallel>], iteration_bounds = array<i64: 1>, scalar_prefetch = 0 : i64, scratch_operands = 0 : i64, tpu.core_type = #tpu.core_type<tc>, window_params = [{transform_indices = @transform_0, window_bounds = array<i64: 16, 16>}, {transform_indices = @transform_1, window_bounds = array<i64: 16, 16>}, {pipeline_mode = #tpu.pipeline_mode<synchronous>, transform_indices = @transform_2, window_bounds = array<i64: 16, 32>}, {pipeline_mode = #tpu.pipeline_mode<synchronous>, transform_indices = @transform_3, window_bounds = array<i64: 16, 32>}, {pipeline_mode = #tpu.pipeline_mode<synchronous>, transform_indices = @transform_4, window_bounds = array<i64: 1, 32>}, {pipeline_mode = #tpu.pipeline_mode<synchronous>, transform_indices = @transform_5, window_bounds = array<i64: 1, 32>}, {pipeline_mode = #tpu.pipeline_mode<synchronous>, transform_indices = @transform_6, window_bounds = array<i64: 1, 32>}, {pipeline_mode = #tpu.pipeline_mode<synchronous>, transform_indices = @transform_7, window_bounds = array<i64: 32, 128>}, {pipeline_mode = #tpu.pipeline_mode<synchronous>, transform_indices = @transform_8, window_bounds = array<i64: 1, 128>}, {transform_indices = @transform_9, window_bounds = array<i64: 16, 128>}]} {
    %c0 = arith.constant 0 : index
    %c0_0 = arith.constant 0 : index
    %0 = vector.load %arg1[%c0, %c0_0] : memref<16x16xf32, #tpu.memory_space<vmem>>, vector<16x16xf32>
    %1 = arith.truncf %0 : vector<16x16xf32> to vector<16x16xbf16>
    %c0_1 = arith.constant 0 : index
    %c0_2 = arith.constant 0 : index
    %2 = vector.load %arg2[%c0_1, %c0_2] : memref<16x16xf32, #tpu.memory_space<vmem>>, vector<16x16xf32>
    %3 = arith.truncf %2 : vector<16x16xf32> to vector<16x16xbf16>
    %c0_3 = arith.constant 0 : index
    %c0_4 = arith.constant 0 : index
    %4 = vector.load %arg3[%c0_3, %c0_4] : memref<16x32xbf16, #tpu.memory_space<vmem>>, vector<16x32xbf16>
    %cst = arith.constant dense<0.000000e+00> : vector<16x32xf32>
    %5 = tpu.matmul %1, %4, %cst {dimension_numbers = #tpu.dot_dimension_numbers<[1], [0], [0], [1], [0, 0, 1, 1], [], []>} : vector<16x16xbf16>, vector<16x32xbf16>, vector<16x32xf32> -> vector<16x32xf32>
    %c0_5 = arith.constant 0 : index
    %c0_6 = arith.constant 0 : index
    %6 = vector.load %arg4[%c0_5, %c0_6] : memref<16x32xbf16, #tpu.memory_space<vmem>>, vector<16x32xbf16>
    %cst_7 = arith.constant dense<0.000000e+00> : vector<16x32xf32>
    %7 = tpu.matmul %3, %6, %cst_7 {dimension_numbers = #tpu.dot_dimension_numbers<[1], [0], [0], [1], [0, 0, 1, 1], [], []>} : vector<16x16xbf16>, vector<16x32xbf16>, vector<16x32xf32> -> vector<16x32xf32>
    %8 = arith.addf %5, %7 : vector<16x32xf32>
    %c0_8 = arith.constant 0 : index
    %c0_9 = arith.constant 0 : index
    %9 = vector.load %arg5[%c0_8, %c0_9] : memref<1x32xf32, #tpu.memory_space<vmem>>, vector<1x32xf32>
    %10 = vector.broadcast %9 : vector<1x32xf32> to vector<16x32xf32>
    %11 = arith.addf %8, %10 : vector<16x32xf32>
    %12 = math.tanh %11 : vector<16x32xf32>
    %cst_10 = arith.constant dense<0.000000e+00> : vector<16xf32>
    %13 = vector.multi_reduction <add>, %12, %cst_10 [1] : vector<16x32xf32> to vector<16xf32>
    %14 = vector.shape_cast %13 : vector<16xf32> to vector<16x1xf32>
    %cst_11 = arith.constant 3.200000e+01 : f32
    %15 = vector.broadcast %cst_11 : f32 to vector<16x1xf32>
    %16 = arith.divf %14, %15 : vector<16x1xf32>
    %17 = arith.mulf %12, %12 : vector<16x32xf32>
    %cst_12 = arith.constant dense<0.000000e+00> : vector<16xf32>
    %18 = vector.multi_reduction <add>, %17, %cst_12 [1] : vector<16x32xf32> to vector<16xf32>
    %19 = vector.shape_cast %18 : vector<16xf32> to vector<16x1xf32>
    %cst_13 = arith.constant 3.200000e+01 : f32
    %20 = vector.broadcast %cst_13 : f32 to vector<16x1xf32>
    %21 = arith.divf %19, %20 : vector<16x1xf32>
    %22 = arith.mulf %16, %16 : vector<16x1xf32>
    %23 = arith.subf %21, %22 : vector<16x1xf32>
    %24 = vector.broadcast %16 : vector<16x1xf32> to vector<16x32xf32>
    %25 = arith.subf %12, %24 : vector<16x32xf32>
    %cst_14 = arith.constant 9.99999974E-6 : f32
    %26 = vector.broadcast %cst_14 : f32 to vector<16x1xf32>
    %27 = arith.addf %23, %26 : vector<16x1xf32>
    %28 = math.rsqrt %27 : vector<16x1xf32>
    %29 = vector.broadcast %28 : vector<16x1xf32> to vector<16x32xf32>
    %30 = arith.mulf %25, %29 : vector<16x32xf32>
    %c0_15 = arith.constant 0 : index
    %c0_16 = arith.constant 0 : index
    %31 = vector.load %arg6[%c0_15, %c0_16] : memref<1x32xf32, #tpu.memory_space<vmem>>, vector<1x32xf32>
    %32 = vector.broadcast %31 : vector<1x32xf32> to vector<16x32xf32>
    %33 = arith.mulf %30, %32 : vector<16x32xf32>
    %c0_17 = arith.constant 0 : index
    %c0_18 = arith.constant 0 : index
    %34 = vector.load %arg7[%c0_17, %c0_18] : memref<1x32xf32, #tpu.memory_space<vmem>>, vector<1x32xf32>
    %35 = vector.broadcast %34 : vector<1x32xf32> to vector<16x32xf32>
    %36 = arith.addf %33, %35 : vector<16x32xf32>
    %37 = arith.truncf %36 : vector<16x32xf32> to vector<16x32xbf16>
    %c0_19 = arith.constant 0 : index
    %c0_20 = arith.constant 0 : index
    %38 = vector.load %arg8[%c0_19, %c0_20] : memref<32x128xbf16, #tpu.memory_space<vmem>>, vector<32x128xbf16>
    %cst_21 = arith.constant dense<0.000000e+00> : vector<16x128xf32>
    %39 = tpu.matmul %37, %38, %cst_21 {dimension_numbers = #tpu.dot_dimension_numbers<[1], [0], [0], [1], [0, 0, 1, 1], [], []>} : vector<16x32xbf16>, vector<32x128xbf16>, vector<16x128xf32> -> vector<16x128xf32>
    %c0_22 = arith.constant 0 : index
    %c0_23 = arith.constant 0 : index
    %40 = vector.load %arg9[%c0_22, %c0_23] : memref<1x128xf32, #tpu.memory_space<vmem>>, vector<1x128xf32>
    %41 = vector.broadcast %40 : vector<1x128xf32> to vector<16x128xf32>
    %42 = arith.addf %39, %41 : vector<16x128xf32>
    %c0_24 = arith.constant 0 : index
    %c0_25 = arith.constant 0 : index
    %43 = vector.load %arg10[%c0_24, %c0_25] : memref<16x128xf32, #tpu.memory_space<vmem>>, vector<16x128xf32>
    tpu.vector_store %arg10[%c0_24, %c0_25], %42 {strides = array<i32>} : memref<16x128xf32, #tpu.memory_space<vmem>>, vector<16x128xf32>,
    return
  }
  func.func @transform_0(%arg0: i32) -> (i32, i32) {
    %c0_i32 = arith.constant 0 : i32
    %c0_i32_0 = arith.constant 0 : i32
    return %arg0, %c0_i32 : i32, i32
  }
  func.func @transform_1(%arg0: i32) -> (i32, i32) {
    %c0_i32 = arith.constant 0 : i32
    %c0_i32_0 = arith.constant 0 : i32
    return %arg0, %c0_i32 : i32, i32
  }
  func.func @transform_2(%arg0: i32) -> (i32, i32) {
    %c0_i32 = arith.constant 0 : i32
    %c0_i32_0 = arith.constant 0 : i32
    %c0_i32_1 = arith.constant 0 : i32
    return %c0_i32, %c0_i32_0 : i32, i32
  }
  func.func @transform_3(%arg0: i32) -> (i32, i32) {
    %c0_i32 = arith.constant 0 : i32
    %c0_i32_0 = arith.constant 0 : i32
    %c0_i32_1 = arith.constant 0 : i32
    return %c0_i32, %c0_i32_0 : i32, i32
  }
  func.func @transform_4(%arg0: i32) -> (i32, i32) {
    %c0_i32 = arith.constant 0 : i32
    %c0_i32_0 = arith.constant 0 : i32
    %c0_i32_1 = arith.constant 0 : i32
    return %c0_i32, %c0_i32_0 : i32, i32
  }
  func.func @transform_5(%arg0: i32) -> (i32, i32) {
    %c0_i32 = arith.constant 0 : i32
    %c0_i32_0 = arith.constant 0 : i32
    %c0_i32_1 = arith.constant 0 : i32
    return %c0_i32, %c0_i32_0 : i32, i32
  }
  func.func @transform_6(%arg0: i32) -> (i32, i32) {
    %c0_i32 = arith.constant 0 : i32
    %c0_i32_0 = arith.constant 0 : i32
    %c0_i32_1 = arith.constant 0 : i32
    return %c0_i32, %c0_i32_0 : i32, i32
  }
  func.func @transform_7(%arg0: i32) -> (i32, i32) {
    %c0_i32 = arith.constant 0 : i32
    %c0_i32_0 = arith.constant 0 : i32
    %c0_i32_1 = arith.constant 0 : i32
    return %c0_i32, %c0_i32_0 : i32, i32
  }
  func.func @transform_8(%arg0: i32) -> (i32, i32) {
    %c0_i32 = arith.constant 0 : i32
    %c0_i32_0 = arith.constant 0 : i32
    %c0_i32_1 = arith.constant 0 : i32
    return %c0_i32, %c0_i32_0 : i32, i32
  }
  func.func @transform_9(%arg0: i32) -> (i32, i32) {
    %c0_i32 = arith.constant 0 : i32
    %c0_i32_0 = arith.constant 0 : i32
    return %arg0, %c0_i32 : i32, i32
  }
}

</mosaic_0001>

<llo_original>
// kernel: tpu_custom_call.1
$region0: #{tpu_custom_call.1}
  #allocation0 [shape = 'u32[]', space=smem, size = 0x4, offset = 0x4, fixed_abs, tag = 'smem constant byte address 0x4 - core index']
  #allocation1 [shape = 'u32[144,128]{1,0:T(1,128)}', space=vmem, size = 0x12000, scoped, tag = 'internal scratch']
  %s0 = inlined_call_operand.hbm [shape: f32[16,16], index: 0, kind: input, shape index: {}]
  %s1 = inlined_call_operand.hbm [shape: f32[16,16], index: 1, kind: input, shape index: {}]
  %s2 = inlined_call_operand.hbm [shape: bf16[16,32], index: 2, kind: input, shape index: {}]
  %s3 = inlined_call_operand.vmem [shape: bf16[16,32], index: 3, kind: input, shape index: {}]
  %s4 = inlined_call_operand.vmem [shape: f32[1,32], index: 4, kind: input, shape index: {}]
  %s5 = inlined_call_operand.vmem [shape: f32[1,32], index: 5, kind: input, shape index: {}]
  %s6 = inlined_call_operand.hbm [shape: f32[1,32], index: 6, kind: input, shape index: {}]
  %s7 = inlined_call_operand.vmem [shape: bf16[32,128], index: 7, kind: input, shape index: {}]
  %s8 = inlined_call_operand.vmem [shape: f32[1,128], index: 8, kind: input, shape index: {}]
  %s9 = inlined_call_operand.hbm [shape: f32[16,128], index: 9, kind: output, shape index: {}]
  %s10 = sld [smem:[#allocation0]]
  $region62: #{tpu_custom_call.1} parent=0
    _
  %s12 = ssub.s32 1, %s10
  %s13 = scalar_select 0, %s12, %s10
  $region1: #{tpu_custom_call.1} parent=0
    #allocation2 [shape = 'u8[8192]{0}', space=vmem, size = 0x2000, scoped, tag = 'input window, operand 0, single buffered']
    #allocation3 [shape = 's32[1]{0}', space=sflag, size = 0x4, scoped, tag = 'scoped memory for tpu_custom_call.1']
    #allocation4 [shape = 's32[1]{0}', space=sflag, size = 0x4, scoped, tag = 'scoped memory for tpu_custom_call.1']
    #allocation5 [shape = 'u8[8192]{0}', space=vmem, size = 0x2000, scoped, tag = 'input window, operand 1, single buffered']
    #allocation6 [shape = 's32[1]{0}', space=sflag, size = 0x4, scoped, tag = 'scoped memory for tpu_custom_call.1']
    #allocation7 [shape = 'u8[4096]{0}', space=vmem, size = 0x1000, scoped, tag = 'input window, operand 2, single buffered']
    #allocation8 [shape = 'u8[512]{0}', space=vmem, size = 0x400, scoped, tag = 'input window, operand 6, single buffered']
    #allocation9 [shape = 's32[1]{0}', space=sflag, size = 0x4, scoped, tag = 'scoped memory for tpu_custom_call.1']
    #allocation10 [shape = 'u8[8192]{0}', space=vmem, size = 0x2000, scoped, tag = 'output window, operand 0, single buffered']
    %14 = vsyncpa [#allocation3], 0
    %15 = vsyncpa [#allocation6], 0
    %16 = vsyncpa [#allocation9], 0
    %17 = vsyncpa [#allocation4], 0
    // Predicated region
    $region2: #{tpu_custom_call.1} parent=1 // pred_check
      _
    $region3: #{tpu_custom_call.1} parent=1 // pred_check_branch
      %19 = sbr.rel (0) target = $region5
    $region4: #{tpu_custom_call.1} parent=1 // pred_region
      %s21 = ssub.s32 256, 256
      %22 = vsyncadd [#allocation3], %s21
      %s23 = sshll.u32 [#allocation2], 4
      %s24 = int_to_ptr.vmem [resolvable:$true] %s23
      %29 = dma.hbm_to_vmem [thread:$0]  %s0, 256, %s24, [#allocation3], 128, 128, 8
    $region5: #{tpu_custom_call.1} parent=1 // pred_fallthru
      _
    // Predicated region
    $region6: #{tpu_custom_call.1} parent=1 // pred_check
      _
    $region7: #{tpu_custom_call.1} parent=1 // pred_check_branch
      %31 = sbr.rel (0) target = $region9
    $region8: #{tpu_custom_call.1} parent=1 // pred_region
      %s33 = ssub.s32 256, 256
      %34 = vsyncadd [#allocation6], %s33
      %s35 = sshll.u32 [#allocation5], 4
      %s36 = int_to_ptr.vmem [resolvable:$true] %s35
      %41 = dma.hbm_to_vmem [thread:$0]  %s1, 256, %s36, [#allocation6], 128, 128, 8
    $region9: #{tpu_custom_call.1} parent=1 // pred_fallthru
      _
    // Predicated region
    $region10: #{tpu_custom_call.1} parent=1 // pred_check
      _
    $region11: #{tpu_custom_call.1} parent=1 // pred_check_branch
      %43 = sbr.rel (0) target = $region13
    $region12: #{tpu_custom_call.1} parent=1 // pred_region
      %s45 = ssub.s32 128, 128
      %46 = vsyncadd [#allocation6], %s45
      %s47 = sshll.u32 [#allocation7], 4
      %s48 = int_to_ptr.vmem [resolvable:$true] %s47
      %53 = dma.hbm_to_vmem [thread:$0]  %s2, 128, %s48, [#allocation6], 64, 64, 4
    $region13: #{tpu_custom_call.1} parent=1 // pred_fallthru
      _
    // Predicated region
    $region14: #{tpu_custom_call.1} parent=1 // pred_check
      _
    $region15: #{tpu_custom_call.1} parent=1 // pred_check_branch
      %55 = sbr.rel (0) target = $region17
    $region16: #{tpu_custom_call.1} parent=1 // pred_region
      _
    $region17: #{tpu_custom_call.1} parent=1 // pred_fallthru
      _
    // Predicated region
    $region18: #{tpu_custom_call.1} parent=1 // pred_check
      _
    $region19: #{tpu_custom_call.1} parent=1 // pred_check_branch
      %57 = sbr.rel (0) target = $region21
    $region20: #{tpu_custom_call.1} parent=1 // pred_region
      _
    $region21: #{tpu_custom_call.1} parent=1 // pred_fallthru
      _
    // Predicated region
    $region22: #{tpu_custom_call.1} parent=1 // pred_check
      _
    $region23: #{tpu_custom_call.1} parent=1 // pred_check_branch
      %59 = sbr.rel (0) target = $region25
    $region24: #{tpu_custom_call.1} parent=1 // pred_region
      _
    $region25: #{tpu_custom_call.1} parent=1 // pred_fallthru
      _
    // Predicated region
    $region26: #{tpu_custom_call.1} parent=1 // pred_check
      _
    $region27: #{tpu_custom_call.1} parent=1 // pred_check_branch
      %61 = sbr.rel (0) target = $region29
    $region28: #{tpu_custom_call.1} parent=1 // pred_region
      %s63 = ssub.s32 16, 16
      %64 = vsyncadd [#allocation9], %s63
      %s66 = sshll.u32 [#allocation8], 4
      %s67 = int_to_ptr.vmem [resolvable:$true] %s66
      %69 = dma.hbm_to_vmem [thread:$0]  %s6, 16, %s67, [#allocation9]
    $region29: #{tpu_custom_call.1} parent=1 // pred_fallthru
      _
    // Predicated region
    $region30: #{tpu_custom_call.1} parent=1 // pred_check
      _
    $region31: #{tpu_custom_call.1} parent=1 // pred_check_branch
      %71 = sbr.rel (0) target = $region33
    $region32: #{tpu_custom_call.1} parent=1 // pred_region
      _
    $region33: #{tpu_custom_call.1} parent=1 // pred_fallthru
      _
    // Predicated region
    $region34: #{tpu_custom_call.1} parent=1 // pred_check
      _
    $region35: #{tpu_custom_call.1} parent=1 // pred_check_branch
      %73 = sbr.rel (0) target = $region37
    $region36: #{tpu_custom_call.1} parent=1 // pred_region
      _
    $region37: #{tpu_custom_call.1} parent=1 // pred_fallthru
      _
    // Predicated region
    $region38: #{tpu_custom_call.1} parent=1 // pred_check
      _
    $region39: #{tpu_custom_call.1} parent=1 // pred_check_branch
      %75 = sbr.rel (0) target = $region41
    $region40: #{tpu_custom_call.1} parent=1 // pred_region
      %76 = dma.done [#allocation3], 256
    $region41: #{tpu_custom_call.1} parent=1 // pred_fallthru
      _
    // Predicated region
    $region42: #{tpu_custom_call.1} parent=1 // pred_check
      _
    $region43: #{tpu_custom_call.1} parent=1 // pred_check_branch
      %78 = sbr.rel (0) target = $region45
    $region44: #{tpu_custom_call.1} parent=1 // pred_region
      %79 = dma.done [#allocation6], 256
    $region45: #{tpu_custom_call.1} parent=1 // pred_fallthru
      _
    // Predicated region
    $region46: #{tpu_custom_call.1} parent=1 // pred_check
      _
    $region47: #{tpu_custom_call.1} parent=1 // pred_check_branch
      %81 = sbr.rel (0) target = $region49
    $region48: #{tpu_custom_call.1} parent=1 // pred_region
      %82 = dma.done [#allocation6], 128
    $region49: #{tpu_custom_call.1} parent=1 // pred_fallthru
      _
    // Predicated region
    $region50: #{tpu_custom_call.1} parent=1 // pred_check
      _
    $region51: #{tpu_custom_call.1} parent=1 // pred_check_branch
      %84 = sbr.rel (0) target = $region53
    $region52: #{tpu_custom_call.1} parent=1 // pred_region
      %85 = dma.done [#allocation9], 16
    $region53: #{tpu_custom_call.1} parent=1 // pred_fallthru
      _
    %v87 = vld [vmem:[#allocation2] sm:$0xff]
    %v88 = vld [vmem:[#allocation2 + $0x8] sm:$0xff]
    %v89 = vpack.c.bf16 %v88, %v87
    %v90 = vld [vmem:[#allocation5] sm:$0xff]
    %v91 = vld [vmem:[#allocation5 + $0x8] sm:$0xff]
    %v92 = vpack.c.bf16 %v91, %v90
    %v93 = vld [vmem:[#allocation7] sm:$0xf]
    %v94 = vld [vmem:[#allocation7 + $0x4] sm:$0xf]
    %v95 = vld [vmem:[%s3] sm:$0xf]
    %v96 = vld [vmem:[%s3 + $0x4] sm:$0xf]
    %v99 = vunpack.c.l.b16 %v95
    %v100 = vunpack.c.l.b16 %v96
    %v101 = vpack.c.b16 %v100, %v99
    %vm103 = vcmask 130048
    %v105 = vsel %vm103, %v92, 0
    %107 = vmatprep.subr.bf16.mxu0 0
    %108 = vmatpush1.bf16.msra.mxu0 %v101
    %109 = vmatprep.subr.bf16.mxu0 0
    %110 = vmatpush1.bf16.msra.mxu0 0
    %111 = vmatprep.subr.bf16.mxu0 0
    %112 = vmatpush1.bf16.msra.mxu0 0
    %113 = vmatprep.subr.bf16.mxu0 0
    %114 = vmatpush1.bf16.msra.mxu0 0
    %115 = vmatprep.subr.bf16.mxu0 0
    %116 = vmatpush1.bf16.msra.mxu0 0
    %117 = vmatprep.subr.bf16.mxu0 0
    %118 = vmatpush1.bf16.msra.mxu0 0
    %119 = vmatprep.subr.bf16.mxu0 0
    %120 = vmatpush1.bf16.msra.mxu0 0
    %121 = vmatprep.subr.bf16.mxu0 0
    %122 = vmatpush1.bf16.msra.mxu0 0
    %123 = vmatprep.subr.bf16.mxu0 0
    %124 = vmatpush1.bf16.msra.mxu0 0
    %125 = vmatprep.subr.bf16.mxu0 0
    %126 = vmatpush1.bf16.msra.mxu0 0
    %127 = vmatprep.subr.bf16.mxu0 0
    %128 = vmatpush1.bf16.msra.mxu0 0
    %129 = vmatprep.subr.bf16.mxu0 0
    %130 = vmatpush1.bf16.msra.mxu0 0
    %131 = vmatprep.subr.bf16.mxu0 0
    %132 = vmatpush1.bf16.msra.mxu0 0
    %133 = vmatprep.subr.bf16.mxu0 0
    %134 = vmatpush1.bf16.msra.mxu0 0
    %135 = vmatprep.subr.bf16.mxu0 0
    %136 = vmatpush1.bf16.msra.mxu0 0
    %137 = vmatprep.subr.bf16.mxu0 0
    %138 = vmatpush1.bf16.msra.mxu0 0
    %139 = vmatprep.mubr.bf16.mxu0 0
    %140 = vmatmul.mubr.bf16.gmra.mrb[0].mxu0 %v105
    %v141 = vpop.f32.mrb[0].mxu0
    %v142 = vadd.f32 0.0, %v141
    %v143 = vpop.f32.mrb[0].mxu0
    %v144 = vpop.f32.mrb[0].mxu0
    %v145 = vadd.f32 0.0, %v144
    %v146 = vpop.f32.mrb[0].mxu0
    %147 = vdwg.mxu0
    %v150 = vunpack.c.l.b16 %v93
    %v151 = vunpack.c.l.b16 %v94
    %v152 = vpack.c.b16 %v151, %v150
    %v155 = vsel %vm103, %v89, 0
    %157 = vmatprep.subr.bf16.mxu0 0
    %158 = vmatpush1.bf16.msra.mxu0 %v152
    %159 = vmatprep.subr.bf16.mxu0 0
    %160 = vmatpush1.bf16.msra.mxu0 0
    %161 = vmatprep.subr.bf16.mxu0 0
    %162 = vmatpush1.bf16.msra.mxu0 0
    %163 = vmatprep.subr.bf16.mxu0 0
    %164 = vmatpush1.bf16.msra.mxu0 0
    %165 = vmatprep.subr.bf16.mxu0 0
    %166 = vmatpush1.bf16.msra.mxu0 0
    %167 = vmatprep.subr.bf16.mxu0 0
    %168 = vmatpush1.bf16.msra.mxu0 0
    %169 = vmatprep.subr.bf16.mxu0 0
    %170 = vmatpush1.bf16.msra.mxu0 0
    %171 = vmatprep.subr.bf16.mxu0 0
    %172 = vmatpush1.bf16.msra.mxu0 0
    %173 = vmatprep.subr.bf16.mxu0 0
    %174 = vmatpush1.bf16.msra.mxu0 0
    %175 = vmatprep.subr.bf16.mxu0 0
    %176 = vmatpush1.bf16.msra.mxu0 0
    %177 = vmatprep.subr.bf16.mxu0 0
    %178 = vmatpush1.bf16.msra.mxu0 0
    %179 = vmatprep.subr.bf16.mxu0 0
    %180 = vmatpush1.bf16.msra.mxu0 0
    %181 = vmatprep.subr.bf16.mxu0 0
    %182 = vmatpush1.bf16.msra.mxu0 0
    %183 = vmatprep.subr.bf16.mxu0 0
    %184 = vmatpush1.bf16.msra.mxu0 0
    %185 = vmatprep.subr.bf16.mxu0 0
    %186 = vmatpush1.bf16.msra.mxu0 0
    %187 = vmatprep.subr.bf16.mxu0 0
    %188 = vmatpush1.bf16.msra.mxu0 0
    %189 = vmatprep.mubr.bf16.mxu0 0
    %190 = vmatmul.mubr.bf16.gmra.mrb[0].mxu0 %v155
    %v191 = vpop.f32.mrb[0].mxu0
    %v192 = vadd.f32 %v142, %v191
    %v193 = vpop.f32.mrb[0].mxu0
    %v194 = vpop.f32.mrb[0].mxu0
    %v195 = vadd.f32 %v145, %v194
    %v196 = vpop.f32.mrb[0].mxu0
    %197 = vdwg.mxu0
    %v198 = vld [vmem:[%s4] sm:$0x1]
    %v200 = vlaneseq
    %v201 = vshrl.u32 %v200, 7
    %v202 = vsub.s32 0, %v201
    %v203 = vrot.slane %v198, %v202
    %v205 = vadd.f32 %v192, %v203
    %v206 = vadd.f32 %v195, %v203
    %v207 = vtanh.pop %v205
    %v208 = vtanh.pop %v206
    %vm209 = vcmask 261120
    %v210 = vsel %vm209, %v207, 0.0
    %211 = vadd.xlane.f32.xlu0 %v210
    %v212 = vpop.xlane.xlu0 %211
    %v213 = vsel %vm209, %v208, 0.0
    %214 = vadd.xlane.f32.xlu0 %v213
    %v215 = vpop.xlane.xlu0 %214
    %v216 = vrcp.pop 32.0
    %v217 = vmul.f32 %v212, %v216
    %v218 = vmul.f32 %v215, %v216
    %v219 = vmul.f32 %v207, %v207
    %v220 = vmul.f32 %v208, %v208
    %v221 = vsel %vm209, %v219, 0.0
    %222 = vadd.xlane.f32.xlu0 %v221
    %v223 = vpop.xlane.xlu0 %222
    %v224 = vsel %vm209, %v220, 0.0
    %225 = vadd.xlane.f32.xlu0 %v224
    %v226 = vpop.xlane.xlu0 %225
    %v227 = vmul.f32 %v223, %v216
    %v228 = vmul.f32 %v226, %v216
    %v229 = vmul.f32 %v217, %v217
    %v230 = vmul.f32 %v218, %v218
    %v231 = vsub.f32 %v227, %v229
    %v232 = vsub.f32 %v228, %v230
    %v233 = vsub.f32 %v207, %v217
    %v234 = vsub.f32 %v208, %v218
    %v235 = vadd.f32 %v231, 1e-05
    %v236 = vadd.f32 %v232, 1e-05
    %v237 = vrsqrt.pop %v235
    %v238 = vrsqrt.pop %v236
    %v239 = vmul.f32 %v233, %v237
    %v240 = vmul.f32 %v234, %v238
    %v241 = vld [vmem:[%s5] sm:$0x1]
    %v243 = vlaneseq
    %v244 = vshrl.u32 %v243, 7
    %v245 = vsub.s32 0, %v244
    %v246 = vrot.slane %v241, %v245
    %v248 = vmul.f32 %v239, %v246
    %v249 = vmul.f32 %v240, %v246
    %v250 = vld [vmem:[#allocation8] sm:$0x1]
    %v252 = vlaneseq
    %v253 = vshrl.u32 %v252, 7
    %v254 = vsub.s32 0, %v253
    %v255 = vrot.slane %v250, %v254
    %v257 = vadd.f32 %v248, %v255
    %v258 = vadd.f32 %v249, %v255
    %v259 = vpack.c.bf16 %v258, %v257
    %v260 = vld [vmem:[%s7] sm:$0xf]
    %v261 = vld [vmem:[%s7 + $0x4] sm:$0xf]
    %v262 = vld [vmem:[%s7 + $0x8] sm:$0xf]
    %v263 = vld [vmem:[%s7 + $0xc] sm:$0xf]
    %v264 = vld [vmem:[%s8] sm:$0x1]
    %v266 = vlaneseq
    %v267 = vshrl.u32 %v266, 7
    %v268 = vsub.s32 0, %v267
    %v269 = vrot.slane %v264, %v268
    %v275 = vunpack.c.l.b16 %v260
    %v276 = vunpack.c.l.b16 %v261
    %v277 = vunpack.c.l.b16 %v262
    %v278 = vunpack.c.l.b16 %v263
    %v279 = vpack.c.b16 %v276, %v275
    %v280 = vpack.c.b16 %v278, %v277
    %v284 = vsel %vm209, %v259, 0
    %286 = vmatprep.subr.bf16.mxu0 0
    %287 = vmatpush1.bf16.msra.mxu0 %v279
    %288 = vmatprep.subr.bf16.mxu0 0
    %289 = vmatpush1.bf16.msra.mxu0 %v280
    %290 = vmatprep.subr.bf16.mxu0 0
    %291 = vmatpush1.bf16.msra.mxu0 0
    %292 = vmatprep.subr.bf16.mxu0 0
    %293 = vmatpush1.bf16.msra.mxu0 0
    %294 = vmatprep.subr.bf16.mxu0 0
    %295 = vmatpush1.bf16.msra.mxu0 0
    %296 = vmatprep.subr.bf16.mxu0 0
    %297 = vmatpush1.bf16.msra.mxu0 0
    %298 = vmatprep.subr.bf16.mxu0 0
    %299 = vmatpush1.bf16.msra.mxu0 0
    %300 = vmatprep.subr.bf16.mxu0 0
    %301 = vmatpush1.bf16.msra.mxu0 0
    %302 = vmatprep.subr.bf16.mxu0 0
    %303 = vmatpush1.bf16.msra.mxu0 0
    %304 = vmatprep.subr.bf16.mxu0 0
    %305 = vmatpush1.bf16.msra.mxu0 0
    %306 = vmatprep.subr.bf16.mxu0 0
    %307 = vmatpush1.bf16.msra.mxu0 0
    %308 = vmatprep.subr.bf16.mxu0 0
    %309 = vmatpush1.bf16.msra.mxu0 0
    %310 = vmatprep.subr.bf16.mxu0 0
    %311 = vmatpush1.bf16.msra.mxu0 0
    %312 = vmatprep.subr.bf16.mxu0 0
    %313 = vmatpush1.bf16.msra.mxu0 0
    %314 = vmatprep.subr.bf16.mxu0 0
    %315 = vmatpush1.bf16.msra.mxu0 0
    %316 = vmatprep.subr.bf16.mxu0 0
    %317 = vmatpush1.bf16.msra.mxu0 0
    %318 = vmatprep.mubr.bf16.mxu0 0
    %319 = vmatmul.mubr.bf16.gmra.mrb[0].mxu0 %v284
    %v320 = vpop.f32.mrb[0].mxu0
    %v321 = vadd.f32 %v269, %v320
    %v322 = vpop.f32.mrb[0].mxu0
    %v323 = vpop.f32.mrb[0].mxu0
    %v324 = vadd.f32 %v269, %v323
    %v325 = vpop.f32.mrb[0].mxu0
    %326 = vdwg.mxu0
    %327 = vst [vmem:[#allocation10] sm:$0xff] %v321
    %328 = vst [vmem:[#allocation10 + $0x8] sm:$0xff] %v324
    // Predicated region
    $region54: #{tpu_custom_call.1} parent=1 // pred_check
      _
    $region55: #{tpu_custom_call.1} parent=1 // pred_check_branch
      %330 = sbr.rel (0) target = $region57
    $region56: #{tpu_custom_call.1} parent=1 // pred_region
      %s332 = ssub.s32 256, 256
      %333 = vsyncadd [#allocation4], %s332
      %s334 = sshll.u32 [#allocation10], 4
      %s335 = int_to_ptr.vmem [resolvable:$true] %s334
      %340 = dma.vmem_to_hbm [thread:$0]  %s335, 256, %s9, [#allocation4], 128, 128, 8
    $region57: #{tpu_custom_call.1} parent=1 // pred_fallthru
      _
    // Predicated region
    $region58: #{tpu_custom_call.1} parent=1 // pred_check
      _
    $region59: #{tpu_custom_call.1} parent=1 // pred_check_branch
      %342 = sbr.rel (0) target = $region61
    $region60: #{tpu_custom_call.1} parent=1 // pred_region
      %343 = dma.done [#allocation4], 256
    $region61: #{tpu_custom_call.1} parent=1 // pred_fallthru
      _
    %344 = vsyncpa [#allocation3], 1
    %345 = vsyncpa [#allocation6], 1
    %346 = vsyncpa [#allocation9], 1
    %347 = vsyncpa [#allocation4], 1

</llo_original>
